<compile_context>
chip_gen: v7x
topology: tpu7x:2x2x1
jax: 0.10.0
libtpu: 0.0.40
codegen_flags: <defaults>
</compile_context>

<pallas_src>
import functools

import jax
import jax.numpy as jnp
from jax.experimental import pallas as pl
from jax.experimental.pallas import tpu as pltpu


def _cos_sim_kernel(x_ref, yt_ref, xn_ref, yn_ref, o_ref, *, inv_temp, eps):
    # x_ref: (TM, H), yt_ref: (H, TN), xn_ref: (TM, 1), yn_ref: (1, TN)
    # MXU matmul with canonical (M,K)x(K,N) layout, f32 accumulation.
    dots = jax.lax.dot_general(
        x_ref[...], yt_ref[...],
        dimension_numbers=(((1,), (0,)), ((), ())),
        preferred_element_type=jnp.float32,
    )                                                          # (TM, TN)
    # torch.nn.CosineSimilarity clamp: max(||x|| * ||y||, eps); exact divide
    # with 1/temp folded in (kept exact for strict torch parity).
    denom = jnp.maximum(xn_ref[...] * yn_ref[...], eps)        # (TM, TN)
    o_ref[...] = (dots * (inv_temp / denom)).astype(o_ref.dtype)


def _round_up(v, m):
    return ((v + m - 1) // m) * m


def _choose_tiles(n, m, h, itemsize):
    # Sublane packing: f32 -> 8 rows/vreg, bf16 -> 16, int8/fp8 -> 32.
    sub = 16 if itemsize == 2 else (32 if itemsize == 1 else 8)
    budget = 40 << 20  # conservative working-set budget (fits v7x 64 MiB VMEM)

    def tile_bytes(tm, tn):
        # double-buffered input tiles + double-buffered f32 output tile
        return 2 * (tm + tn) * h * itemsize + 2 * tm * tn * 4

    tm = min(_round_up(n, sub), 512)
    tn = min(_round_up(m, 128), 512)

    # Shrink until the pipelined working set fits the VMEM budget.
    # TODO(synk): for extremely large H add K-tiling with an f32 accumulator
    # instead of shrinking TM/TN all the way down.
    while tile_bytes(tm, tn) > budget and (tm > sub or tn > 128):
        if tm >= tn and tm > sub:
            tm = max(sub, _round_up(tm // 2, sub))
        elif tn > 128:
            tn = max(128, _round_up(tn // 2, 128))
        elif tm > sub:
            tm = max(sub, _round_up(tm // 2, sub))
        else:
            break

    # Keep >=2 grid blocks on one parallel axis when the problem allows so
    # both v7x TensorCores get work (megacore sharding).
    if _round_up(n, tm) // tm == 1 and _round_up(m, tn) // tn == 1:
        if n > sub and tm > sub:
            tm = max(sub, _round_up(-(-n // 2), sub))
        elif m > 128 and tn > 128:
            tn = max(128, _round_up(-(-m // 2), 128))

    return tm, tn, tile_bytes(tm, tn)


def similarity(x, y, temp=0.05, eps=1e-8):
    """Pallas equivalent of Similarity.forward.

    x: (N, 1, H), y: (1, M, H)  ->  (N, M) float32
    """
    assert x.ndim == 3 and y.ndim == 3
    n, _, h = x.shape
    _, m, h2 = y.shape
    assert h == h2

    x2d = x.reshape(n, h)   # glue: drop broadcast dims
    y2d = y.reshape(m, h)

    # Precompute per-row L2 norms once (tiny O(N*H)/O(M*H) XLA reductions);
    # the kernel then only does the MXU matmul + a cheap epilogue.
    xf = x2d.astype(jnp.float32)
    yf = y2d.astype(jnp.float32)
    xn = jnp.sqrt(jnp.sum(xf * xf, axis=-1, keepdims=True))       # (n, 1)
    yn = jnp.sqrt(jnp.sum(yf * yf, axis=-1, keepdims=True)).T     # (1, m)

    itemsize = jnp.dtype(x2d.dtype).itemsize
    tm, tn, need = _choose_tiles(n, m, h, itemsize)

    n_pad = _round_up(n, tm)
    m_pad = _round_up(m, tn)
    if n_pad != n:
        x2d = jnp.pad(x2d, ((0, n_pad - n), (0, 0)))
        xn = jnp.pad(xn, ((0, n_pad - n), (0, 0)))
    if m_pad != m:
        y2d = jnp.pad(y2d, ((0, m_pad - m), (0, 0)))
        yn = jnp.pad(yn, ((0, 0), (0, m_pad - m)))
    # Padded rows/cols are zero vectors: dots are 0, denom clamps to eps, and
    # the corresponding output rows/cols are sliced away below.

    # One-time XLA transpose so each RHS tile reaches the MXU with K on
    # sublanes ((K, N) layout); amortized over all row tiles.
    yt = y2d.T                                                    # (h, m_pad)

    kernel = functools.partial(
        _cos_sim_kernel, inv_temp=float(1.0 / temp), eps=float(eps))

    grid = (n_pad // tm, m_pad // tn)
    vmem_limit = int(min(96 << 20, max(32 << 20, need + (8 << 20))))

    out = pl.pallas_call(
        kernel,
        out_shape=jax.ShapeDtypeStruct((n_pad, m_pad), jnp.float32),
        grid=grid,
        in_specs=[
            pl.BlockSpec((tm, h), lambda i, j: (i, 0)),    # x rows
            pl.BlockSpec((h, tn), lambda i, j: (0, j)),    # y^T cols
            pl.BlockSpec((tm, 1), lambda i, j: (i, 0)),    # ||x|| per row
            pl.BlockSpec((1, tn), lambda i, j: (0, j)),    # ||y|| per col
        ],
        out_specs=pl.BlockSpec((tm, tn), lambda i, j: (i, j)),
        compiler_params=pltpu.CompilerParams(
            dimension_semantics=("parallel", "parallel"),
            vmem_limit_bytes=vmem_limit,
        ),
    )(x2d, yt, xn, yn)

    return out[:n, :m]


def _reference(x, y, temp=0.05, eps=1e-8):
    # Pure-JAX reference matching torch.nn.CosineSimilarity(dim=-1) / temp.
    num = jnp.sum(x * y, axis=-1)
    den = jnp.maximum(
        jnp.linalg.norm(x, axis=-1) * jnp.linalg.norm(y, axis=-1), eps)
    return num / den / temp


if __name__ == "__main__":
    key = jax.random.PRNGKey(0)
    temp = 0.05

    # Case 1: small SimCSE-style shapes.
    k1, k2 = jax.random.split(key)
    N, M, H = 8, 8, 32
    x = jax.random.normal(k1, (N, 1, H), dtype=jnp.float32)
    y = jax.random.normal(k2, (1, M, H), dtype=jnp.float32)
    out = jax.block_until_ready(similarity(x, y, temp=temp))
    ref = _reference(x, y, temp=temp)
    assert out.shape == (N, M)
    assert jnp.allclose(out, ref, atol=1e-4, rtol=1e-4), "mismatch vs reference (case 1)"

    # Case 2: non-tile-multiple shapes to exercise padding / multi-block grid.
    k3, k4 = jax.random.split(k2)
    N2, M2, H2 = 24, 136, 40
    x2 = jax.random.normal(k3, (N2, 1, H2), dtype=jnp.float32)
    y2 = jax.random.normal(k4, (1, M2, H2), dtype=jnp.float32)
    out2 = jax.block_until_ready(similarity(x2, y2, temp=temp))
    ref2 = _reference(x2, y2, temp=temp)
    assert out2.shape == (N2, M2)
    assert jnp.allclose(out2, ref2, atol=1e-4, rtol=1e-4), "mismatch vs reference (case 2)"

    print("KERNEL_OK")
</pallas_src>

<mosaic_0001>
module attributes {stable_mosaic.version = 11 : i64} {
  func.func @_cos_sim_kernel(%arg0: i32, %arg1: i32, %arg2: memref<8x32xf32, #tpu.memory_space<vmem>>, %arg3: memref<32x128xf32, #tpu.memory_space<vmem>>, %arg4: memref<8x1xf32, #tpu.memory_space<vmem>>, %arg5: memref<1x128xf32, #tpu.memory_space<vmem>>, %arg6: memref<8x128xf32, #tpu.memory_space<vmem>>) attributes {dimension_semantics = [#tpu.dimension_semantics<parallel>, #tpu.dimension_semantics<parallel>], iteration_bounds = array<i64: 1, 1>, scalar_prefetch = 0 : i64, scratch_operands = 0 : i64, tpu.core_type = #tpu.core_type<tc>, window_params = [{transform_indices = @transform_0, window_bounds = array<i64: 8, 32>}, {transform_indices = @transform_1, window_bounds = array<i64: 32, 128>}, {transform_indices = @transform_2, window_bounds = array<i64: 8, 1>}, {transform_indices = @transform_3, window_bounds = array<i64: 1, 128>}, {transform_indices = @transform_4, window_bounds = array<i64: 8, 128>}]} {
    %c0 = arith.constant 0 : index
    %c0_0 = arith.constant 0 : index
    %0 = vector.load %arg2[%c0, %c0_0] : memref<8x32xf32, #tpu.memory_space<vmem>>, vector<8x32xf32>
    %c0_1 = arith.constant 0 : index
    %c0_2 = arith.constant 0 : index
    %1 = vector.load %arg3[%c0_1, %c0_2] : memref<32x128xf32, #tpu.memory_space<vmem>>, vector<32x128xf32>
    %cst = arith.constant dense<0.000000e+00> : vector<8x128xf32>
    %2 = tpu.matmul %0, %1, %cst {dimension_numbers = #tpu.dot_dimension_numbers<[1], [0], [0], [1], [0, 0, 1, 1], [], []>} : vector<8x32xf32>, vector<32x128xf32>, vector<8x128xf32> -> vector<8x128xf32>
    %c0_3 = arith.constant 0 : index
    %c0_4 = arith.constant 0 : index
    %3 = vector.load %arg4[%c0_3, %c0_4] : memref<8x1xf32, #tpu.memory_space<vmem>>, vector<8x1xf32>
    %c0_5 = arith.constant 0 : index
    %c0_6 = arith.constant 0 : index
    %4 = vector.load %arg5[%c0_5, %c0_6] : memref<1x128xf32, #tpu.memory_space<vmem>>, vector<1x128xf32>
    %5 = vector.broadcast %3 : vector<8x1xf32> to vector<8x128xf32>
    %6 = vector.broadcast %4 : vector<1x128xf32> to vector<8x128xf32>
    %7 = arith.mulf %5, %6 : vector<8x128xf32>
    %cst_7 = arith.constant 9.99999993E-9 : f32
    %8 = vector.broadcast %cst_7 : f32 to vector<8x128xf32>
    %9 = arith.maximumf %7, %8 : vector<8x128xf32>
    %cst_8 = arith.constant 2.000000e+01 : f32
    %10 = vector.broadcast %cst_8 : f32 to vector<8x128xf32>
    %11 = arith.divf %10, %9 : vector<8x128xf32>
    %12 = arith.mulf %2, %11 : vector<8x128xf32>
    %c0_9 = arith.constant 0 : index
    %c0_10 = arith.constant 0 : index
    %13 = vector.load %arg6[%c0_9, %c0_10] : memref<8x128xf32, #tpu.memory_space<vmem>>, vector<8x128xf32>
    tpu.vector_store %arg6[%c0_9, %c0_10], %12 {strides = array<i32>} : memref<8x128xf32, #tpu.memory_space<vmem>>, vector<8x128xf32>,
    return
  }
  func.func @transform_0(%arg0: i32, %arg1: i32) -> (i32, i32) {
    %c0_i32 = arith.constant 0 : i32
    %c0_i32_0 = arith.constant 0 : i32
    return %arg0, %c0_i32 : i32, i32
  }
  func.func @transform_1(%arg0: i32, %arg1: i32) -> (i32, i32) {
    %c0_i32 = arith.constant 0 : i32
    %c0_i32_0 = arith.constant 0 : i32
    return %c0_i32, %arg1 : i32, i32
  }
  func.func @transform_2(%arg0: i32, %arg1: i32) -> (i32, i32) {
    %c0_i32 = arith.constant 0 : i32
    %c0_i32_0 = arith.constant 0 : i32
    return %arg0, %c0_i32 : i32, i32
  }
  func.func @transform_3(%arg0: i32, %arg1: i32) -> (i32, i32) {
    %c0_i32 = arith.constant 0 : i32
    %c0_i32_0 = arith.constant 0 : i32
    return %c0_i32, %arg1 : i32, i32
  }
  func.func @transform_4(%arg0: i32, %arg1: i32) -> (i32, i32) {
    %c0_i32 = arith.constant 0 : i32
    return %arg0, %arg1 : i32, i32
  }
}

</mosaic_0001>

<llo_original>
// kernel: tpu_custom_call.1
$region0: #{tpu_custom_call.1}
  #allocation0 [shape = 'u32[]', space=smem, size = 0x4, offset = 0x4, fixed_abs, tag = 'smem constant byte address 0x4 - core index']
  #allocation1 [shape = 'u32[144,128]{1,0:T(1,128)}', space=vmem, size = 0x12000, scoped, tag = 'internal scratch']
  %s0 = inlined_call_operand.vmem [shape: f32[8,32], index: 0, kind: input, shape index: {}]
  %s1 = inlined_call_operand.hbm [shape: f32[32,128], index: 1, kind: input, shape index: {}]
  %s2 = inlined_call_operand.vmem [shape: f32[8,1], index: 2, kind: input, shape index: {}]
  %s3 = inlined_call_operand.vmem [shape: f32[1,128], index: 3, kind: input, shape index: {}]
  %s4 = inlined_call_operand.hbm [shape: f32[8,128], index: 4, kind: output, shape index: {}]
  %s5 = sld [smem:[#allocation0]]
  $region30: #{tpu_custom_call.1} parent=0
    _
  %s7 = ssub.s32 1, %s5
  %s8 = scalar_select 0, %s7, %s5
  $region1: #{tpu_custom_call.1} parent=0
    #allocation2 [shape = 'u8[16384]{0}', space=vmem, size = 0x4000, scoped, tag = 'input window, operand 1, single buffered']
    #allocation3 [shape = 's32[1]{0}', space=sflag, size = 0x4, scoped, tag = 'scoped memory for tpu_custom_call.1']
    #allocation4 [shape = 's32[1]{0}', space=sflag, size = 0x4, scoped, tag = 'scoped memory for tpu_custom_call.1']
    #allocation5 [shape = 'u8[4096]{0}', space=vmem, size = 0x1000, scoped, tag = 'output window, operand 0, single buffered']
    %9 = vsyncpa [#allocation3], 0
    %10 = vsyncpa [#allocation4], 0
    // Predicated region
    $region2: #{tpu_custom_call.1} parent=1 // pred_check
      _
    $region3: #{tpu_custom_call.1} parent=1 // pred_check_branch
      %12 = sbr.rel (0) target = $region5
    $region4: #{tpu_custom_call.1} parent=1 // pred_region
      _
    $region5: #{tpu_custom_call.1} parent=1 // pred_fallthru
      _
    // Predicated region
    $region6: #{tpu_custom_call.1} parent=1 // pred_check
      _
    $region7: #{tpu_custom_call.1} parent=1 // pred_check_branch
      %14 = sbr.rel (0) target = $region9
    $region8: #{tpu_custom_call.1} parent=1 // pred_region
      %s16 = ssub.s32 512, 512
      %17 = vsyncadd [#allocation3], %s16
      %s18 = sshll.u32 [#allocation2], 4
      %s19 = int_to_ptr.vmem [resolvable:$true] %s18
      %24 = dma.hbm_to_vmem [thread:$0]  %s1, 512, %s19, [#allocation3], 128, 128, 8
    $region9: #{tpu_custom_call.1} parent=1 // pred_fallthru
      _
    // Predicated region
    $region10: #{tpu_custom_call.1} parent=1 // pred_check
      _
    $region11: #{tpu_custom_call.1} parent=1 // pred_check_branch
      %26 = sbr.rel (0) target = $region13
    $region12: #{tpu_custom_call.1} parent=1 // pred_region
      _
    $region13: #{tpu_custom_call.1} parent=1 // pred_fallthru
      _
    // Predicated region
    $region14: #{tpu_custom_call.1} parent=1 // pred_check
      _
    $region15: #{tpu_custom_call.1} parent=1 // pred_check_branch
      %28 = sbr.rel (0) target = $region17
    $region16: #{tpu_custom_call.1} parent=1 // pred_region
      _
    $region17: #{tpu_custom_call.1} parent=1 // pred_fallthru
      _
    // Predicated region
    $region18: #{tpu_custom_call.1} parent=1 // pred_check
      _
    $region19: #{tpu_custom_call.1} parent=1 // pred_check_branch
      %30 = sbr.rel (0) target = $region21
    $region20: #{tpu_custom_call.1} parent=1 // pred_region
      %31 = dma.done [#allocation3], 512
    $region21: #{tpu_custom_call.1} parent=1 // pred_fallthru
      _
    %v32 = vld [vmem:[%s0] sm:$0xff]
    %v33 = vld [vmem:[#allocation2] sm:$0xff]
    %v34 = vld [vmem:[#allocation2 + $0x8] sm:$0xff]
    %v35 = vld [vmem:[#allocation2 + $0x10] sm:$0xff]
    %v36 = vld [vmem:[#allocation2 + $0x18] sm:$0xff]
    %vm37 = vcmask 261120
    %v39 = vsel %vm37, %v32, 0
    %41 = vmatprep.subr.mxu0 0.0
    %42 = vmatpush1.msra.mxu0 %v33
    %43 = vmatprep.subr.mxu0 0.0
    %44 = vmatpush1.msra.mxu0 %v34
    %45 = vmatprep.subr.mxu0 0.0
    %46 = vmatpush1.msra.mxu0 %v35
    %47 = vmatprep.subr.mxu0 0.0
    %48 = vmatpush1.msra.mxu0 %v36
    %49 = vmatprep.subr.mxu0 0.0
    %50 = vmatpush1.msra.mxu0 0.0
    %51 = vmatprep.subr.mxu0 0.0
    %52 = vmatpush1.msra.mxu0 0.0
    %53 = vmatprep.subr.mxu0 0.0
    %54 = vmatpush1.msra.mxu0 0.0
    %55 = vmatprep.subr.mxu0 0.0
    %56 = vmatpush1.msra.mxu0 0.0
    %57 = vmatprep.subr.mxu0 0.0
    %58 = vmatpush1.msra.mxu0 0.0
    %59 = vmatprep.subr.mxu0 0.0
    %60 = vmatpush1.msra.mxu0 0.0
    %61 = vmatprep.subr.mxu0 0.0
    %62 = vmatpush1.msra.mxu0 0.0
    %63 = vmatprep.subr.mxu0 0.0
    %64 = vmatpush1.msra.mxu0 0.0
    %65 = vmatprep.subr.mxu0 0.0
    %66 = vmatpush1.msra.mxu0 0.0
    %67 = vmatprep.subr.mxu0 0.0
    %68 = vmatpush1.msra.mxu0 0.0
    %69 = vmatprep.subr.mxu0 0.0
    %70 = vmatpush1.msra.mxu0 0.0
    %71 = vmatprep.subr.mxu0 0.0
    %72 = vmatpush1.msra.mxu0 0.0
    %73 = vmatprep.subr.mxu0 0.0
    %74 = vmatpush1.msra.mxu0 0.0
    %75 = vmatprep.subr.mxu0 0.0
    %76 = vmatpush1.msra.mxu0 0.0
    %77 = vmatprep.subr.mxu0 0.0
    %78 = vmatpush1.msra.mxu0 0.0
    %79 = vmatprep.subr.mxu0 0.0
    %80 = vmatpush1.msra.mxu0 0.0
    %81 = vmatprep.subr.mxu0 0.0
    %82 = vmatpush1.msra.mxu0 0.0
    %83 = vmatprep.subr.mxu0 0.0
    %84 = vmatpush1.msra.mxu0 0.0
    %85 = vmatprep.subr.mxu0 0.0
    %86 = vmatpush1.msra.mxu0 0.0
    %87 = vmatprep.subr.mxu0 0.0
    %88 = vmatpush1.msra.mxu0 0.0
    %89 = vmatprep.subr.mxu0 0.0
    %90 = vmatpush1.msra.mxu0 0.0
    %91 = vmatprep.subr.mxu0 0.0
    %92 = vmatpush1.msra.mxu0 0.0
    %93 = vmatprep.subr.mxu0 0.0
    %94 = vmatpush1.msra.mxu0 0.0
    %95 = vmatprep.subr.mxu0 0.0
    %96 = vmatpush1.msra.mxu0 0.0
    %97 = vmatprep.subr.mxu0 0.0
    %98 = vmatpush1.msra.mxu0 0.0
    %99 = vmatprep.subr.mxu0 0.0
    %100 = vmatpush1.msra.mxu0 0.0
    %101 = vmatprep.subr.mxu0 0.0
    %102 = vmatpush1.msra.mxu0 0.0
    %103 = vmatprep.subr.mxu0 0.0
    %104 = vmatpush1.msra.mxu0 0.0
    %105 = vmatprep.mubr.f32.mxu0 0.0
    %106 = vmatmul.mubr.f32.gmra.mrb[0].mxu0 %v39
    %v107 = vpop.f32.mrb[0].mxu0
    %v108 = vadd.f32 0.0, %v107
    %v109 = vpop.f32.mrb[0].mxu0
    %110 = vdwg.mxu0
    %v111 = vld [vmem:[%s2] sm:$0xff]
    %v112 = vld [vmem:[%s3] sm:$0x1]
    %114 = vset.pattern.permute.xlu0 0
    %115 = vperm.xlu0 %114, %v111
    %v116 = vpop.permute.xlu0 %115
    %v119 = vlaneseq
    %v120 = vshrl.u32 %v119, 7
    %v121 = vsub.s32 0, %v120
    %v122 = vrot.slane %v112, %v121
    %v124 = vmul.f32 %v116, %v122
    %v125 = vmax.f32 %v124, 1e-08
    %v126 = vrcp.pop %v125
    %v127 = vmul.f32 20.0, %v126
    %v128 = vmul.f32 %v108, %v127
    %129 = vst [vmem:[#allocation5] sm:$0xff] %v128
    // Predicated region
    $region22: #{tpu_custom_call.1} parent=1 // pred_check
      _
    $region23: #{tpu_custom_call.1} parent=1 // pred_check_branch
      %131 = sbr.rel (0) target = $region25
    $region24: #{tpu_custom_call.1} parent=1 // pred_region
      %s133 = ssub.s32 128, 128
      %134 = vsyncadd [#allocation4], %s133
      %s136 = sshll.u32 [#allocation5], 4
      %s137 = int_to_ptr.vmem [resolvable:$true] %s136
      %139 = dma.vmem_to_hbm [thread:$0]  %s137, 128, %s4, [#allocation4]
    $region25: #{tpu_custom_call.1} parent=1 // pred_fallthru
      _
    // Predicated region
    $region26: #{tpu_custom_call.1} parent=1 // pred_check
      _
    $region27: #{tpu_custom_call.1} parent=1 // pred_check_branch
      %141 = sbr.rel (0) target = $region29
    $region28: #{tpu_custom_call.1} parent=1 // pred_region
      %142 = dma.done [#allocation4], 128
    $region29: #{tpu_custom_call.1} parent=1 // pred_fallthru
      _
    %143 = vsyncpa [#allocation3], 1
    %144 = vsyncpa [#allocation4], 1

</llo_original>
